<compile_context>
chip_gen: v6e
topology: v6e:2x2x1
jax: 0.10.0
libtpu: 0.0.40
codegen_flags: <defaults>
</compile_context>

<pallas_src>
import math

import jax
import jax.numpy as jnp
from jax.experimental import pallas as pl
from jax.experimental.pallas import tpu as pltpu


def _round_up(x, m):
    return ((x + m - 1) // m) * m


# ---------------------------------------------------------------------------
# Kernels
# ---------------------------------------------------------------------------
def _linear_kernel_single_k(x_ref, w_ref, b_ref, o_ref):
    # x_ref: (tm, K)  w_ref: (K, tn)  b_ref: (1, tn)  o_ref: (tm, tn)
    acc = jnp.dot(x_ref[...], w_ref[...], preferred_element_type=jnp.float32)
    o_ref[...] = (acc + b_ref[...].astype(jnp.float32)).astype(o_ref.dtype)


def _linear_kernel_multi_k(x_ref, w_ref, b_ref, o_ref, acc_ref):
    # x_ref: (tm, tk)  w_ref: (tk, tn)  b_ref: (1, tn)  o_ref: (tm, tn)
    # acc_ref: (tm, tn) f32 scratch, persistent across the K grid axis.
    k = pl.program_id(2)

    @pl.when(k == 0)
    def _():
        acc_ref[...] = jnp.zeros_like(acc_ref)

    acc_ref[...] += jnp.dot(x_ref[...], w_ref[...],
                            preferred_element_type=jnp.float32)

    @pl.when(k == pl.num_programs(2) - 1)
    def _():
        o_ref[...] = (acc_ref[...]
                      + b_ref[...].astype(jnp.float32)).astype(o_ref.dtype)


# ---------------------------------------------------------------------------
# Helpers
# ---------------------------------------------------------------------------
def _pick_k_tile(k_dim, max_tk):
    """K tile must divide in_dim exactly (a ragged K block would pollute the
    accumulator with out-of-bounds garbage)."""
    if k_dim <= max_tk:
        return k_dim
    for cand in (512, 384, 256, 128):
        if cand <= max_tk and k_dim % cand == 0:
            return cand
    # TODO(synk): ragged K would need in-kernel masking; fall back to full K.
    return k_dim


def _single_buffered_spec(shape, index_map):
    """BlockSpec with buffer_count=1 for grid-invariant blocks (saves VMEM).

    Falls back to a plain (double-buffered) spec if this JAX version's
    BlockSpec does not accept pipeline_mode.
    """
    try:
        return pl.BlockSpec(shape, index_map, pipeline_mode=pl.Buffered(1))
    except TypeError:
        return pl.BlockSpec(shape, index_map)


# ---------------------------------------------------------------------------
# Public entry point
# ---------------------------------------------------------------------------
def linear_norm(x, wt, bias, *, tm=256, tn=512, tk=512,
                compute_dtype=None, vmem_budget_bytes=24 * 1024 * 1024):
    """y = x @ wt + bias  (== PyTorch LinearNorm.forward).

    x:    (..., in_dim)
    wt:   (in_dim, out_dim)   -- weight stored pre-transposed
    bias: (out_dim,)
    """
    in_dim, out_dim = wt.shape
    assert x.shape[-1] == in_dim
    lead = x.shape[:-1]
    m = math.prod(lead) if lead else 1           # static python int (jit-safe)
    x2d = x.reshape(m, in_dim)

    out_dtype = x.dtype
    if compute_dtype is not None:
        x2d = x2d.astype(compute_dtype)
        wt = wt.astype(compute_dtype)

    # Lane-dense output: pad N up to a multiple of 128 (touches only the small
    # weight/bias; real Tacotron2 dims (256/512/1024) need no padding).
    n_pad = _round_up(out_dim, 128)
    if n_pad != out_dim:
        wt = jnp.pad(wt, ((0, 0), (0, n_pad - out_dim)))
        bias = jnp.pad(bias, (0, n_pad - out_dim))
    b2d = bias.reshape(1, n_pad)

    # ---- tile selection -------------------------------------------------
    tm_eff = min(_round_up(tm, 8), _round_up(m, 8))     # M: sublane multiple
    tn_eff = min(_round_up(tn, 128), n_pad)             # N: lane multiple
    tk_eff = _pick_k_tile(in_dim, max(tk, 128))         # K: divides in_dim

    # Keep the (double-buffered) working set well inside the 32 MiB scoped
    # VMEM default -- v7x has only 64 MiB physical VMEM.
    def _vmem_bytes(tm_):
        in_b = x2d.dtype.itemsize
        out_b = jnp.dtype(out_dtype).itemsize
        return (2 * tm_ * tk_eff * in_b          # x tiles
                + 2 * tk_eff * tn_eff * in_b     # weight tiles
                + 2 * tm_ * tn_eff * out_b       # output tiles
                + tm_ * tn_eff * 4               # f32 accumulator
                + 2 * tn_eff * 4)                # bias
    while tm_eff > 8 and _vmem_bytes(tm_eff) > vmem_budget_bytes:
        tm_eff = max(8, _round_up(tm_eff // 2, 8))

    m_tiles = pl.cdiv(m, tm_eff)
    n_tiles = pl.cdiv(n_pad, tn_eff)
    k_tiles = pl.cdiv(in_dim, tk_eff)

    if k_tiles == 1:
        # -------- fast path: single K block, no accumulator --------------
        x_spec = pl.BlockSpec((tm_eff, tk_eff), lambda i, j: (i, 0))
        if n_tiles == 1:
            # Whole weight / bias are grid-invariant: single-buffer them.
            w_spec = _single_buffered_spec((tk_eff, tn_eff), lambda i, j: (0, j))
            b_spec = _single_buffered_spec((1, tn_eff), lambda i, j: (0, j))
        else:
            w_spec = pl.BlockSpec((tk_eff, tn_eff), lambda i, j: (0, j))
            b_spec = pl.BlockSpec((1, tn_eff), lambda i, j: (0, j))

        out = pl.pallas_call(
            _linear_kernel_single_k,
            out_shape=jax.ShapeDtypeStruct((m, n_pad), out_dtype),
            grid_spec=pltpu.PrefetchScalarGridSpec(
                num_scalar_prefetch=0,
                grid=(m_tiles, n_tiles),
                in_specs=[x_spec, w_spec, b_spec],
                out_specs=pl.BlockSpec((tm_eff, tn_eff), lambda i, j: (i, j)),
            ),
            compiler_params=pltpu.CompilerParams(
                dimension_semantics=("parallel", "parallel")),
        )(x2d, wt, b2d)
    else:
        # -------- general path: K-tiled accumulation ----------------------
        x_spec = pl.BlockSpec((tm_eff, tk_eff), lambda i, j, k: (i, k))
        w_spec = pl.BlockSpec((tk_eff, tn_eff), lambda i, j, k: (k, j))
        if n_tiles == 1:
            b_spec = _single_buffered_spec((1, tn_eff), lambda i, j, k: (0, j))
        else:
            b_spec = pl.BlockSpec((1, tn_eff), lambda i, j, k: (0, j))

        out = pl.pallas_call(
            _linear_kernel_multi_k,
            out_shape=jax.ShapeDtypeStruct((m, n_pad), out_dtype),
            grid_spec=pltpu.PrefetchScalarGridSpec(
                num_scalar_prefetch=0,
                grid=(m_tiles, n_tiles, k_tiles),
                in_specs=[x_spec, w_spec, b_spec],
                out_specs=pl.BlockSpec((tm_eff, tn_eff),
                                       lambda i, j, k: (i, j)),
                scratch_shapes=[pltpu.VMEM((tm_eff, tn_eff), jnp.float32)],
            ),
            compiler_params=pltpu.CompilerParams(
                dimension_semantics=("parallel", "parallel", "arbitrary")),
        )(x2d, wt, b2d)

    if n_pad != out_dim:
        out = out[:, :out_dim]
    return out.reshape(*lead, out_dim)


def init_linear_norm_params(key, in_dim, out_dim, w_init_gain="linear",
                            dtype=jnp.float32):
    """Xavier-uniform weight (stored pre-transposed) + nn.Linear default bias."""
    gain = {"linear": 1.0, "sigmoid": 1.0, "tanh": 5.0 / 3.0,
            "relu": math.sqrt(2.0)}[w_init_gain]
    k_w, k_b = jax.random.split(key)
    # xavier_uniform_ bound is symmetric in (fan_in, fan_out), so initializing
    # the transposed (in_dim, out_dim) layout directly is equivalent.
    bound_w = gain * math.sqrt(6.0 / (in_dim + out_dim))
    wt = jax.random.uniform(k_w, (in_dim, out_dim), dtype,
                            minval=-bound_w, maxval=bound_w)
    bound_b = 1.0 / math.sqrt(in_dim)
    bias = jax.random.uniform(k_b, (out_dim,), dtype,
                              minval=-bound_b, maxval=bound_b)
    return wt, bias


if __name__ == "__main__":
    key = jax.random.PRNGKey(0)
    k_x, k_p, k_x2, k_p2 = jax.random.split(key, 4)

    # --- test 1: small dims, single-K fast path, ragged N (64 -> pad 128) ---
    batch, seq, in_dim, out_dim = 2, 8, 32, 64
    x = jax.random.normal(k_x, (batch, seq, in_dim), jnp.float32)
    wt, bias = init_linear_norm_params(k_p, in_dim, out_dim)

    y = jax.block_until_ready(linear_norm(x, wt, bias))
    y_ref = x @ wt + bias
    assert y.shape == (batch, seq, out_dim)
    assert jnp.allclose(y, y_ref, atol=1e-5, rtol=1e-5)

    # bf16 compute path (v6e / v7x MXU fast path), f32 accumulation.
    y_bf16 = jax.block_until_ready(
        linear_norm(x, wt, bias, compute_dtype=jnp.bfloat16))
    assert y_bf16.dtype == jnp.float32
    assert jnp.allclose(y_bf16, y_ref, atol=1e-1, rtol=1e-1)

    # --- test 2: K-tiled accumulator path (tk=128 forces k_tiles=2) ---------
    in_dim2, out_dim2 = 256, 96
    x2 = jax.random.normal(k_x2, (batch, seq, in_dim2), jnp.float32)
    wt2, bias2 = init_linear_norm_params(k_p2, in_dim2, out_dim2)

    y2 = jax.block_until_ready(linear_norm(x2, wt2, bias2, tk=128))
    y2_ref = x2 @ wt2 + bias2
    assert y2.shape == (batch, seq, out_dim2)
    assert jnp.allclose(y2, y2_ref, atol=1e-4, rtol=1e-4)

    print("KERNEL_OK")
</pallas_src>

<mosaic_0001>
module attributes {stable_mosaic.version = 11 : i64} {
  func.func @_linear_kernel_single_k(%arg0: i32, %arg1: i32, %arg2: memref<16x32xf32, #tpu.memory_space<vmem>>, %arg3: memref<32x128xf32, #tpu.memory_space<vmem>>, %arg4: memref<1x128xf32, #tpu.memory_space<vmem>>, %arg5: memref<16x128xf32, #tpu.memory_space<vmem>>) attributes {dimension_semantics = [#tpu.dimension_semantics<parallel>, #tpu.dimension_semantics<parallel>], iteration_bounds = array<i64: 1, 1>, scalar_prefetch = 0 : i64, scratch_operands = 0 : i64, tpu.core_type = #tpu.core_type<tc>, window_params = [{transform_indices = @transform_0, window_bounds = array<i64: 16, 32>}, {pipeline_mode = #tpu.pipeline_mode<synchronous>, transform_indices = @transform_1, window_bounds = array<i64: 32, 128>}, {pipeline_mode = #tpu.pipeline_mode<synchronous>, transform_indices = @transform_2, window_bounds = array<i64: 1, 128>}, {transform_indices = @transform_3, window_bounds = array<i64: 16, 128>}]} {
    %c0 = arith.constant 0 : index
    %c0_0 = arith.constant 0 : index
    %0 = vector.load %arg2[%c0, %c0_0] : memref<16x32xf32, #tpu.memory_space<vmem>>, vector<16x32xf32>
    %c0_1 = arith.constant 0 : index
    %c0_2 = arith.constant 0 : index
    %1 = vector.load %arg3[%c0_1, %c0_2] : memref<32x128xf32, #tpu.memory_space<vmem>>, vector<32x128xf32>
    %cst = arith.constant dense<0.000000e+00> : vector<16x128xf32>
    %2 = tpu.matmul %0, %1, %cst {dimension_numbers = #tpu.dot_dimension_numbers<[1], [0], [0], [1], [0, 0, 1, 1], [], []>} : vector<16x32xf32>, vector<32x128xf32>, vector<16x128xf32> -> vector<16x128xf32>
    %c0_3 = arith.constant 0 : index
    %c0_4 = arith.constant 0 : index
    %3 = vector.load %arg4[%c0_3, %c0_4] : memref<1x128xf32, #tpu.memory_space<vmem>>, vector<1x128xf32>
    %4 = vector.broadcast %3 : vector<1x128xf32> to vector<16x128xf32>
    %5 = arith.addf %2, %4 : vector<16x128xf32>
    %c0_5 = arith.constant 0 : index
    %c0_6 = arith.constant 0 : index
    %6 = vector.load %arg5[%c0_5, %c0_6] : memref<16x128xf32, #tpu.memory_space<vmem>>, vector<16x128xf32>
    tpu.vector_store %arg5[%c0_5, %c0_6], %5 {strides = array<i32>} : memref<16x128xf32, #tpu.memory_space<vmem>>, vector<16x128xf32>,
    return
  }
  func.func @transform_0(%arg0: i32, %arg1: i32) -> (i32, i32) {
    %c0_i32 = arith.constant 0 : i32
    %c0_i32_0 = arith.constant 0 : i32
    return %arg0, %c0_i32 : i32, i32
  }
  func.func @transform_1(%arg0: i32, %arg1: i32) -> (i32, i32) {
    %c0_i32 = arith.constant 0 : i32
    %c0_i32_0 = arith.constant 0 : i32
    return %c0_i32, %arg1 : i32, i32
  }
  func.func @transform_2(%arg0: i32, %arg1: i32) -> (i32, i32) {
    %c0_i32 = arith.constant 0 : i32
    %c0_i32_0 = arith.constant 0 : i32
    return %c0_i32, %arg1 : i32, i32
  }
  func.func @transform_3(%arg0: i32, %arg1: i32) -> (i32, i32) {
    %c0_i32 = arith.constant 0 : i32
    return %arg0, %arg1 : i32, i32
  }
}

</mosaic_0001>

<llo_original>
// kernel: tpu_custom_call.1
$region0: #{tpu_custom_call.1}
  #allocation0 [shape = 'u32[]', space=smem, size = 0x4, offset = 0x4, fixed_abs, tag = 'smem constant byte address 0x4 - core index']
  #allocation1 [shape = 'u32[144,128]{1,0:T(1,128)}', space=vmem, size = 0x12000, scoped, tag = 'internal scratch']
  %s0 = inlined_call_operand.hbm [shape: f32[16,32], index: 0, kind: input, shape index: {}]
  %s1 = inlined_call_operand.hbm [shape: f32[32,128], index: 1, kind: input, shape index: {}]
  %s2 = inlined_call_operand.vmem [shape: f32[1,128], index: 2, kind: input, shape index: {}]
  %s3 = inlined_call_operand.hbm [shape: f32[16,128], index: 3, kind: output, shape index: {}]
  %s4 = sld [smem:[#allocation0]]
  $region30: #{tpu_custom_call.1} parent=0
    _
  %s6 = ssub.s32 1, %s4
  %s7 = scalar_select 0, %s6, %s4
  $region1: #{tpu_custom_call.1} parent=0
    #allocation2 [shape = 'u8[8192]{0}', space=vmem, size = 0x2000, scoped, tag = 'input window, operand 0, single buffered']
    #allocation3 [shape = 's32[1]{0}', space=sflag, size = 0x4, scoped, tag = 'scoped memory for tpu_custom_call.1']
    #allocation4 [shape = 's32[1]{0}', space=sflag, size = 0x4, scoped, tag = 'scoped memory for tpu_custom_call.1']
    #allocation5 [shape = 'u8[16384]{0}', space=vmem, size = 0x4000, scoped, tag = 'input window, operand 1, single buffered']
    #allocation6 [shape = 's32[1]{0}', space=sflag, size = 0x4, scoped, tag = 'scoped memory for tpu_custom_call.1']
    #allocation7 [shape = 'u8[8192]{0}', space=vmem, size = 0x2000, scoped, tag = 'output window, operand 0, single buffered']
    %8 = vsyncpa [#allocation3], 0
    %9 = vsyncpa [#allocation6], 0
    %10 = vsyncpa [#allocation4], 0
    // Predicated region
    $region2: #{tpu_custom_call.1} parent=1 // pred_check
      _
    $region3: #{tpu_custom_call.1} parent=1 // pred_check_branch
      %12 = sbr.rel (0) target = $region5
    $region4: #{tpu_custom_call.1} parent=1 // pred_region
      %s14 = ssub.s32 256, 256
      %15 = vsyncadd [#allocation3], %s14
      %s16 = sshll.u32 [#allocation2], 4
      %s17 = int_to_ptr.vmem [resolvable:$true] %s16
      %22 = dma.hbm_to_vmem [thread:$0]  %s0, 256, %s17, [#allocation3], 128, 128, 8
    $region5: #{tpu_custom_call.1} parent=1 // pred_fallthru
      _
    // Predicated region
    $region6: #{tpu_custom_call.1} parent=1 // pred_check
      _
    $region7: #{tpu_custom_call.1} parent=1 // pred_check_branch
      %24 = sbr.rel (0) target = $region9
    $region8: #{tpu_custom_call.1} parent=1 // pred_region
      %s26 = ssub.s32 512, 512
      %27 = vsyncadd [#allocation6], %s26
      %s28 = sshll.u32 [#allocation5], 4
      %s29 = int_to_ptr.vmem [resolvable:$true] %s28
      %34 = dma.hbm_to_vmem [thread:$0]  %s1, 512, %s29, [#allocation6], 128, 128, 8
    $region9: #{tpu_custom_call.1} parent=1 // pred_fallthru
      _
    // Predicated region
    $region10: #{tpu_custom_call.1} parent=1 // pred_check
      _
    $region11: #{tpu_custom_call.1} parent=1 // pred_check_branch
      %36 = sbr.rel (0) target = $region13
    $region12: #{tpu_custom_call.1} parent=1 // pred_region
      _
    $region13: #{tpu_custom_call.1} parent=1 // pred_fallthru
      _
    // Predicated region
    $region14: #{tpu_custom_call.1} parent=1 // pred_check
      _
    $region15: #{tpu_custom_call.1} parent=1 // pred_check_branch
      %38 = sbr.rel (0) target = $region17
    $region16: #{tpu_custom_call.1} parent=1 // pred_region
      %39 = dma.done [#allocation3], 256
    $region17: #{tpu_custom_call.1} parent=1 // pred_fallthru
      _
    // Predicated region
    $region18: #{tpu_custom_call.1} parent=1 // pred_check
      _
    $region19: #{tpu_custom_call.1} parent=1 // pred_check_branch
      %41 = sbr.rel (0) target = $region21
    $region20: #{tpu_custom_call.1} parent=1 // pred_region
      %42 = dma.done [#allocation6], 512
    $region21: #{tpu_custom_call.1} parent=1 // pred_fallthru
      _
    %v43 = vld [vmem:[#allocation2] sm:$0xff]
    %v44 = vld [vmem:[#allocation2 + $0x8] sm:$0xff]
    %v45 = vld [vmem:[#allocation5] sm:$0xff]
    %v46 = vld [vmem:[#allocation5 + $0x8] sm:$0xff]
    %v47 = vld [vmem:[#allocation5 + $0x10] sm:$0xff]
    %v48 = vld [vmem:[#allocation5 + $0x18] sm:$0xff]
    %v49 = vld [vmem:[%s2] sm:$0x1]
    %v51 = vlaneseq
    %v52 = vshrl.u32 %v51, 7
    %v53 = vsub.s32 0, %v52
    %v54 = vrot.slane %v49, %v53
    %vm56 = vcmask 261120
    %v58 = vsel %vm56, %v43, 0
    %v61 = vsel %vm56, %v44, 0
    %63 = vmatprep.subr.mxu0 0.0
    %64 = vmatpush1.msra.mxu0 0.0
    %65 = vmatprep.subr.mxu0 0.0
    %66 = vmatpush1.msra.mxu0 0.0
    %67 = vmatprep.subr.mxu0 0.0
    %68 = vmatpush1.msra.mxu0 0.0
    %69 = vmatprep.subr.mxu0 0.0
    %70 = vmatpush1.msra.mxu0 0.0
    %71 = vmatprep.subr.mxu0 0.0
    %72 = vmatpush1.msra.mxu0 0.0
    %73 = vmatprep.subr.mxu0 0.0
    %74 = vmatpush1.msra.mxu0 0.0
    %75 = vmatprep.subr.mxu0 0.0
    %76 = vmatpush1.msra.mxu0 0.0
    %77 = vmatprep.subr.mxu0 0.0
    %78 = vmatpush1.msra.mxu0 0.0
    %79 = vmatprep.subr.mxu0 0.0
    %80 = vmatpush1.msra.mxu0 0.0
    %81 = vmatprep.subr.mxu0 0.0
    %82 = vmatpush1.msra.mxu0 0.0
    %83 = vmatprep.subr.mxu0 0.0
    %84 = vmatpush1.msra.mxu0 0.0
    %85 = vmatprep.subr.mxu0 0.0
    %86 = vmatpush1.msra.mxu0 0.0
    %87 = vmatprep.subr.mxu0 0.0
    %88 = vmatpush1.msra.mxu0 %v48
    %89 = vmatprep.subr.mxu0 0.0
    %90 = vmatpush1.msra.mxu0 %v47
    %91 = vmatprep.subr.mxu0 0.0
    %92 = vmatpush1.msra.mxu0 %v46
    %93 = vmatprep.subr.mxu0 0.0
    %94 = vmatpush1.msra.mxu0 %v45
    %95 = vmatprep.subr.mxu0 0.0
    %96 = vmatpush2.msra.mxu0 0.0
    %97 = vmatprep.subr.mxu0 0.0
    %98 = vmatpush2.msra.mxu0 0.0
    %99 = vmatprep.subr.mxu0 0.0
    %100 = vmatpush2.msra.mxu0 0.0
    %101 = vmatprep.subr.mxu0 0.0
    %102 = vmatpush2.msra.mxu0 0.0
    %103 = vmatprep.subr.mxu0 0.0
    %104 = vmatpush2.msra.mxu0 0.0
    %105 = vmatprep.subr.mxu0 0.0
    %106 = vmatpush2.msra.mxu0 0.0
    %107 = vmatprep.subr.mxu0 0.0
    %108 = vmatpush2.msra.mxu0 0.0
    %109 = vmatprep.subr.mxu0 0.0
    %110 = vmatpush2.msra.mxu0 0.0
    %111 = vmatprep.subr.mxu0 0.0
    %112 = vmatpush2.msra.mxu0 0.0
    %113 = vmatprep.subr.mxu0 0.0
    %114 = vmatpush2.msra.mxu0 0.0
    %115 = vmatprep.subr.mxu0 0.0
    %116 = vmatpush2.msra.mxu0 0.0
    %117 = vmatprep.subr.mxu0 0.0
    %118 = vmatpush2.msra.mxu0 0.0
    %119 = vmatprep.subr.mxu0 0.0
    %120 = vmatpush2.msra.mxu0 0.0
    %121 = vmatprep.subr.mxu0 0.0
    %122 = vmatpush2.msra.mxu0 0.0
    %123 = vmatprep.subr.mxu0 0.0
    %124 = vmatpush2.msra.mxu0 0.0
    %125 = vmatprep.subr.mxu0 0.0
    %126 = vmatpush2.msra.mxu0 0.0
    %127 = vmatprep.mubr.f32.mxu0 0.0
    %128 = vmatmul.mubr.f32.gmra.mxu0 %v58
    %v129 = vpop.f32.mrf.mxu0
    %v130 = vadd.f32 %v54, %v129
    %v131 = vpop.f32.mrf.mxu0
    %132 = vmatprep.mubr.f32.mxu0 0.0
    %133 = vmatmul.mubr.f32.gmra.mxu0 %v61
    %v134 = vpop.f32.mrf.mxu0
    %v135 = vadd.f32 %v54, %v134
    %v136 = vpop.f32.mrf.mxu0
    %137 = vdwg.mxu0
    %138 = vst [vmem:[#allocation7] sm:$0xff] %v130
    %139 = vst [vmem:[#allocation7 + $0x8] sm:$0xff] %v135
    // Predicated region
    $region22: #{tpu_custom_call.1} parent=1 // pred_check
      _
    $region23: #{tpu_custom_call.1} parent=1 // pred_check_branch
      %141 = sbr.rel (0) target = $region25
    $region24: #{tpu_custom_call.1} parent=1 // pred_region
      %s143 = ssub.s32 256, 256
      %144 = vsyncadd [#allocation4], %s143
      %s145 = sshll.u32 [#allocation7], 4
      %s146 = int_to_ptr.vmem [resolvable:$true] %s145
      %151 = dma.vmem_to_hbm [thread:$0]  %s146, 256, %s3, [#allocation4], 128, 128, 8
    $region25: #{tpu_custom_call.1} parent=1 // pred_fallthru
      _
    // Predicated region
    $region26: #{tpu_custom_call.1} parent=1 // pred_check
      _
    $region27: #{tpu_custom_call.1} parent=1 // pred_check_branch
      %153 = sbr.rel (0) target = $region29
    $region28: #{tpu_custom_call.1} parent=1 // pred_region
      %154 = dma.done [#allocation4], 256
    $region29: #{tpu_custom_call.1} parent=1 // pred_fallthru
      _
    %155 = vsyncpa [#allocation3], 1
    %156 = vsyncpa [#allocation6], 1
    %157 = vsyncpa [#allocation4], 1

</llo_original>
